<compile_context>
chip_gen: v6e
topology: v6e:2x2x1
jax: 0.10.0
libtpu: 0.0.40
codegen_flags: <defaults>
</compile_context>

<pallas_src>
import functools

import jax
import jax.numpy as jnp
from jax.experimental import pallas as pl
from jax.experimental.pallas import tpu as pltpu


def _round_up(x, m):
    return ((x + m - 1) // m) * m


def _predictor_kernel(x_ref, w_ref, b_ref, out_ref):
    # Single fused MXU matmul (f32 accumulate) + VPU bias add.
    out_ref[...] = (
        jnp.dot(x_ref[...], w_ref[...], preferred_element_type=jnp.float32)
        + b_ref[...]
    ).astype(out_ref.dtype)


def fuse_predictor_params(w_cls, b_cls, w_bbox, b_bbox):
    """One-time parameter packing (do this at init, NOT per forward call).

    Converts PyTorch nn.Linear layouts ([out, in] weights) into a single fused
    [C, K_pad] weight and [1, K_pad] bias, with K_pad a multiple of 128 so the
    kernel's output stores are lane-dense.
    """
    kc = w_cls.shape[0]
    kb = w_bbox.shape[0]
    k_total = kc + kb
    k_pad = _round_up(max(k_total, 128), 128)

    w_fused = jnp.concatenate([w_cls, w_bbox], axis=0).T          # [C, Kc+Kb]
    b_fused = jnp.concatenate([b_cls, b_bbox], axis=0)[None, :]   # [1, Kc+Kb]
    if k_pad != k_total:
        w_fused = jnp.pad(w_fused, ((0, 0), (0, k_pad - k_total)))
        b_fused = jnp.pad(b_fused, ((0, 0), (0, k_pad - k_total)))
    # TODO(synk): optionally cast w_fused (and x in the kernel) to bfloat16 on
    # v6e/v7x for ~2x MXU/HBM throughput; kept f32 here for exact parity.
    return w_fused, b_fused, kc, kb


@functools.partial(jax.jit, static_argnames=("kc", "kb", "tile_n"))
def fast_rcnn_predictor_fused(x, w_fused, b_fused, kc, kb, *, tile_n=512):
    """Forward pass with pre-fused params (see fuse_predictor_params)."""
    if x.ndim == 4:
        assert x.shape[2] == 1 and x.shape[3] == 1
    x = x.reshape(x.shape[0], -1)  # flatten(start_dim=1)

    n, c = x.shape
    k_pad = w_fused.shape[1]
    out_dtype = x.dtype
    itemsize = jnp.dtype(out_dtype).itemsize

    # Row tiling: TN is a multiple of 8 (sublane group); pad N so the grid
    # divides evenly (padded rows are sliced off after the call).
    tn = min(tile_n, _round_up(n, 8))
    tn = _round_up(tn, 8)
    n_pad = _round_up(n, tn)
    if n_pad != n:
        x = jnp.pad(x, ((0, n_pad - n), (0, 0)))
    grid = (n_pad // tn,)

    cost = pl.CostEstimate(
        flops=2 * n_pad * c * k_pad,
        transcendentals=0,
        bytes_accessed=(
            n_pad * c * itemsize                                   # x
            + w_fused.size * jnp.dtype(w_fused.dtype).itemsize     # weights
            + b_fused.size * jnp.dtype(b_fused.dtype).itemsize     # bias
            + n_pad * k_pad * itemsize                             # output
        ),
    )

    out = pl.pallas_call(
        _predictor_kernel,
        out_shape=jax.ShapeDtypeStruct((n_pad, k_pad), out_dtype),
        grid=grid,
        in_specs=[
            pl.BlockSpec((tn, c), lambda i: (i, 0)),       # streamed rows
            pl.BlockSpec((c, k_pad), lambda i: (0, 0)),    # resident weights
            pl.BlockSpec((1, k_pad), lambda i: (0, 0)),    # resident bias
        ],
        out_specs=pl.BlockSpec((tn, k_pad), lambda i: (i, 0)),
        compiler_params=pltpu.CompilerParams(
            dimension_semantics=("parallel",),
        ),
        cost_estimate=cost,
    )(x, w_fused, b_fused)

    scores = out[:n, :kc]
    bbox_deltas = out[:n, kc:kc + kb]
    return scores, bbox_deltas


def fast_rcnn_predictor(x, w_cls, b_cls, w_bbox, b_bbox):
    """Convenience wrapper taking PyTorch-layout params.

    Prefer calling fuse_predictor_params once and reusing the fused params
    across forward calls (the fusion/transpose is a one-time cost there).
    """
    w_fused, b_fused, kc, kb = fuse_predictor_params(w_cls, b_cls, w_bbox, b_bbox)
    return fast_rcnn_predictor_fused(x, w_fused, b_fused, kc, kb)


def init_params(key, in_channels, num_classes):
    """Deterministic nn.Linear-style init (uniform +/- 1/sqrt(fan_in))."""
    k1, k2, k3, k4 = jax.random.split(key, 4)
    bound = 1.0 / jnp.sqrt(jnp.float32(in_channels))
    w_cls = jax.random.uniform(
        k1, (num_classes, in_channels), jnp.float32, -bound, bound)
    b_cls = jax.random.uniform(
        k2, (num_classes,), jnp.float32, -bound, bound)
    w_bbox = jax.random.uniform(
        k3, (num_classes * 4, in_channels), jnp.float32, -bound, bound)
    b_bbox = jax.random.uniform(
        k4, (num_classes * 4,), jnp.float32, -bound, bound)
    return w_cls, b_cls, w_bbox, b_bbox


if __name__ == "__main__":
    key = jax.random.PRNGKey(0)
    k_x, k_p = jax.random.split(key)

    N = 2
    IN_CHANNELS = 128
    NUM_CLASSES = 8

    # ROI-pooled features, NCHW with 1x1 spatial (as asserted by the module).
    x = jax.random.normal(k_x, (N, IN_CHANNELS, 1, 1), jnp.float32)
    w_cls, b_cls, w_bbox, b_bbox = init_params(k_p, IN_CHANNELS, NUM_CLASSES)

    # One-time parameter fusion (transpose + concat + pad to 128 lanes).
    w_fused, b_fused, kc, kb = fuse_predictor_params(w_cls, b_cls, w_bbox, b_bbox)

    scores, bbox_deltas = fast_rcnn_predictor_fused(x, w_fused, b_fused, kc, kb)
    jax.block_until_ready((scores, bbox_deltas))

    # Reference check in plain JAX.
    x_flat = x.reshape(N, -1)
    ref_scores = x_flat @ w_cls.T + b_cls
    ref_bbox = x_flat @ w_bbox.T + b_bbox
    assert scores.shape == (N, NUM_CLASSES)
    assert bbox_deltas.shape == (N, NUM_CLASSES * 4)
    assert jnp.allclose(scores, ref_scores, atol=1e-5)
    assert jnp.allclose(bbox_deltas, ref_bbox, atol=1e-5)

    print("KERNEL_OK")
</pallas_src>

<mosaic_0001>
module attributes {stable_mosaic.version = 11 : i64} {
  func.func @_predictor_kernel(%arg0: i32, %arg1: memref<8x128xf32, #tpu.memory_space<vmem>>, %arg2: memref<128x128xf32, #tpu.memory_space<vmem>>, %arg3: memref<1x128xf32, #tpu.memory_space<vmem>>, %arg4: memref<8x128xf32, #tpu.memory_space<vmem>>) attributes {dimension_semantics = [#tpu.dimension_semantics<parallel>], iteration_bounds = array<i64: 1>, scalar_prefetch = 0 : i64, scratch_operands = 0 : i64, tpu.core_type = #tpu.core_type<tc>, window_params = [{transform_indices = @transform_0, window_bounds = array<i64: 8, 128>}, {pipeline_mode = #tpu.pipeline_mode<synchronous>, transform_indices = @transform_1, window_bounds = array<i64: 128, 128>}, {pipeline_mode = #tpu.pipeline_mode<synchronous>, transform_indices = @transform_2, window_bounds = array<i64: 1, 128>}, {transform_indices = @transform_3, window_bounds = array<i64: 8, 128>}]} {
    %c0 = arith.constant 0 : index
    %c0_0 = arith.constant 0 : index
    %0 = vector.load %arg1[%c0, %c0_0] : memref<8x128xf32, #tpu.memory_space<vmem>>, vector<8x128xf32>
    %c0_1 = arith.constant 0 : index
    %c0_2 = arith.constant 0 : index
    %1 = vector.load %arg2[%c0_1, %c0_2] : memref<128x128xf32, #tpu.memory_space<vmem>>, vector<128x128xf32>
    %cst = arith.constant dense<0.000000e+00> : vector<8x128xf32>
    %2 = tpu.matmul %0, %1, %cst {dimension_numbers = #tpu.dot_dimension_numbers<[1], [0], [0], [1], [0, 0, 1, 1], [], []>} : vector<8x128xf32>, vector<128x128xf32>, vector<8x128xf32> -> vector<8x128xf32>
    %c0_3 = arith.constant 0 : index
    %c0_4 = arith.constant 0 : index
    %3 = vector.load %arg3[%c0_3, %c0_4] : memref<1x128xf32, #tpu.memory_space<vmem>>, vector<1x128xf32>
    %4 = vector.broadcast %3 : vector<1x128xf32> to vector<8x128xf32>
    %5 = arith.addf %2, %4 : vector<8x128xf32>
    %c0_5 = arith.constant 0 : index
    %c0_6 = arith.constant 0 : index
    %6 = vector.load %arg4[%c0_5, %c0_6] : memref<8x128xf32, #tpu.memory_space<vmem>>, vector<8x128xf32>
    tpu.vector_store %arg4[%c0_5, %c0_6], %5 {strides = array<i32>} : memref<8x128xf32, #tpu.memory_space<vmem>>, vector<8x128xf32>,
    return
  }
  func.func @transform_0(%arg0: i32) -> (i32, i32) {
    %c0_i32 = arith.constant 0 : i32
    %c0_i32_0 = arith.constant 0 : i32
    return %arg0, %c0_i32 : i32, i32
  }
  func.func @transform_1(%arg0: i32) -> (i32, i32) {
    %c0_i32 = arith.constant 0 : i32
    %c0_i32_0 = arith.constant 0 : i32
    %c0_i32_1 = arith.constant 0 : i32
    return %c0_i32, %c0_i32_0 : i32, i32
  }
  func.func @transform_2(%arg0: i32) -> (i32, i32) {
    %c0_i32 = arith.constant 0 : i32
    %c0_i32_0 = arith.constant 0 : i32
    %c0_i32_1 = arith.constant 0 : i32
    return %c0_i32, %c0_i32_0 : i32, i32
  }
  func.func @transform_3(%arg0: i32) -> (i32, i32) {
    %c0_i32 = arith.constant 0 : i32
    %c0_i32_0 = arith.constant 0 : i32
    return %arg0, %c0_i32 : i32, i32
  }
}

</mosaic_0001>

<llo_original>
// kernel: fast_rcnn_predictor_fused.1
$region0: #{fast_rcnn_predictor_fused.1}
  #allocation0 [shape = 'u32[]', space=smem, size = 0x4, offset = 0x4, fixed_abs, tag = 'smem constant byte address 0x4 - core index']
  #allocation1 [shape = 'u32[144,128]{1,0:T(1,128)}', space=vmem, size = 0x12000, scoped, tag = 'internal scratch']
  %s0 = inlined_call_operand.vmem [shape: f32[8,128], index: 0, kind: input, shape index: {}]
  %s1 = inlined_call_operand.hbm [shape: f32[128,128], index: 1, kind: input, shape index: {}]
  %s2 = inlined_call_operand.vmem [shape: f32[1,128], index: 2, kind: input, shape index: {}]
  %s3 = inlined_call_operand.vmem [shape: f32[8,128], index: 3, kind: output, shape index: {}]
  %s4 = sld [smem:[#allocation0]]
  $region26: #{fast_rcnn_predictor_fused.1} parent=0
    _
  %s6 = ssub.s32 1, %s4
  %s7 = scalar_select 0, %s6, %s4
  $region1: #{fast_rcnn_predictor_fused.1} parent=0
    #allocation2 [shape = 'u8[65536]{0}', space=vmem, size = 0x10000, scoped, tag = 'input window, operand 1, single buffered']
    #allocation3 [shape = 's32[1]{0}', space=sflag, size = 0x4, scoped, tag = 'scoped memory for fast_rcnn_predictor_fused.1']
    %8 = vsyncpa [#allocation3], 0
    // Predicated region
    $region2: #{fast_rcnn_predictor_fused.1} parent=1 // pred_check
      _
    $region3: #{fast_rcnn_predictor_fused.1} parent=1 // pred_check_branch
      %10 = sbr.rel (0) target = $region5
    $region4: #{fast_rcnn_predictor_fused.1} parent=1 // pred_region
      _
    $region5: #{fast_rcnn_predictor_fused.1} parent=1 // pred_fallthru
      _
    // Predicated region
    $region6: #{fast_rcnn_predictor_fused.1} parent=1 // pred_check
      _
    $region7: #{fast_rcnn_predictor_fused.1} parent=1 // pred_check_branch
      %12 = sbr.rel (0) target = $region9
    $region8: #{fast_rcnn_predictor_fused.1} parent=1 // pred_region
      %s14 = ssub.s32 2048, 2048
      %15 = vsyncadd [#allocation3], %s14
      %s16 = sshll.u32 [#allocation2], 4
      %s17 = int_to_ptr.vmem [resolvable:$true] %s16
      %22 = dma.hbm_to_vmem [thread:$0]  %s1, 2048, %s17, [#allocation3], 128, 128, 8
    $region9: #{fast_rcnn_predictor_fused.1} parent=1 // pred_fallthru
      _
    // Predicated region
    $region10: #{fast_rcnn_predictor_fused.1} parent=1 // pred_check
      _
    $region11: #{fast_rcnn_predictor_fused.1} parent=1 // pred_check_branch
      %24 = sbr.rel (0) target = $region13
    $region12: #{fast_rcnn_predictor_fused.1} parent=1 // pred_region
      _
    $region13: #{fast_rcnn_predictor_fused.1} parent=1 // pred_fallthru
      _
    // Predicated region
    $region14: #{fast_rcnn_predictor_fused.1} parent=1 // pred_check
      _
    $region15: #{fast_rcnn_predictor_fused.1} parent=1 // pred_check_branch
      %26 = sbr.rel (0) target = $region17
    $region16: #{fast_rcnn_predictor_fused.1} parent=1 // pred_region
      %27 = dma.done [#allocation3], 2048
    $region17: #{fast_rcnn_predictor_fused.1} parent=1 // pred_fallthru
      _
    %v28 = vld [vmem:[%s0] sm:$0xff]
    %v29 = vld [vmem:[#allocation2] sm:$0xff]
    %v30 = vld [vmem:[#allocation2 + $0x8] sm:$0xff]
    %v31 = vld [vmem:[#allocation2 + $0x10] sm:$0xff]
    %v32 = vld [vmem:[#allocation2 + $0x18] sm:$0xff]
    %v33 = vld [vmem:[#allocation2 + $0x20] sm:$0xff]
    %v34 = vld [vmem:[#allocation2 + $0x28] sm:$0xff]
    %v35 = vld [vmem:[#allocation2 + $0x30] sm:$0xff]
    %v36 = vld [vmem:[#allocation2 + $0x38] sm:$0xff]
    %v37 = vld [vmem:[#allocation2 + $0x40] sm:$0xff]
    %v38 = vld [vmem:[#allocation2 + $0x48] sm:$0xff]
    %v39 = vld [vmem:[#allocation2 + $0x50] sm:$0xff]
    %v40 = vld [vmem:[#allocation2 + $0x58] sm:$0xff]
    %v41 = vld [vmem:[#allocation2 + $0x60] sm:$0xff]
    %v42 = vld [vmem:[#allocation2 + $0x68] sm:$0xff]
    %v43 = vld [vmem:[#allocation2 + $0x70] sm:$0xff]
    %v44 = vld [vmem:[#allocation2 + $0x78] sm:$0xff]
    %v45 = vld [vmem:[%s2] sm:$0x1]
    %v47 = vlaneseq
    %v48 = vshrl.u32 %v47, 7
    %v49 = vsub.s32 0, %v48
    %v50 = vrot.slane %v45, %v49
    %52 = vmatprep.subr.mxu0 0.0
    %53 = vmatpush1.msra.mxu0 %v44
    %54 = vmatprep.subr.mxu0 0.0
    %55 = vmatpush1.msra.mxu0 %v43
    %56 = vmatprep.subr.mxu0 0.0
    %57 = vmatpush1.msra.mxu0 %v42
    %58 = vmatprep.subr.mxu0 0.0
    %59 = vmatpush1.msra.mxu0 %v41
    %60 = vmatprep.subr.mxu0 0.0
    %61 = vmatpush1.msra.mxu0 %v40
    %62 = vmatprep.subr.mxu0 0.0
    %63 = vmatpush1.msra.mxu0 %v39
    %64 = vmatprep.subr.mxu0 0.0
    %65 = vmatpush1.msra.mxu0 %v38
    %66 = vmatprep.subr.mxu0 0.0
    %67 = vmatpush1.msra.mxu0 %v37
    %68 = vmatprep.subr.mxu0 0.0
    %69 = vmatpush1.msra.mxu0 %v36
    %70 = vmatprep.subr.mxu0 0.0
    %71 = vmatpush1.msra.mxu0 %v35
    %72 = vmatprep.subr.mxu0 0.0
    %73 = vmatpush1.msra.mxu0 %v34
    %74 = vmatprep.subr.mxu0 0.0
    %75 = vmatpush1.msra.mxu0 %v33
    %76 = vmatprep.subr.mxu0 0.0
    %77 = vmatpush1.msra.mxu0 %v32
    %78 = vmatprep.subr.mxu0 0.0
    %79 = vmatpush1.msra.mxu0 %v31
    %80 = vmatprep.subr.mxu0 0.0
    %81 = vmatpush1.msra.mxu0 %v30
    %82 = vmatprep.subr.mxu0 0.0
    %83 = vmatpush1.msra.mxu0 %v29
    %84 = vmatprep.subr.mxu0 0.0
    %85 = vmatpush2.msra.mxu0 0.0
    %86 = vmatprep.subr.mxu0 0.0
    %87 = vmatpush2.msra.mxu0 0.0
    %88 = vmatprep.subr.mxu0 0.0
    %89 = vmatpush2.msra.mxu0 0.0
    %90 = vmatprep.subr.mxu0 0.0
    %91 = vmatpush2.msra.mxu0 0.0
    %92 = vmatprep.subr.mxu0 0.0
    %93 = vmatpush2.msra.mxu0 0.0
    %94 = vmatprep.subr.mxu0 0.0
    %95 = vmatpush2.msra.mxu0 0.0
    %96 = vmatprep.subr.mxu0 0.0
    %97 = vmatpush2.msra.mxu0 0.0
    %98 = vmatprep.subr.mxu0 0.0
    %99 = vmatpush2.msra.mxu0 0.0
    %100 = vmatprep.subr.mxu0 0.0
    %101 = vmatpush2.msra.mxu0 0.0
    %102 = vmatprep.subr.mxu0 0.0
    %103 = vmatpush2.msra.mxu0 0.0
    %104 = vmatprep.subr.mxu0 0.0
    %105 = vmatpush2.msra.mxu0 0.0
    %106 = vmatprep.subr.mxu0 0.0
    %107 = vmatpush2.msra.mxu0 0.0
    %108 = vmatprep.subr.mxu0 0.0
    %109 = vmatpush2.msra.mxu0 0.0
    %110 = vmatprep.subr.mxu0 0.0
    %111 = vmatpush2.msra.mxu0 0.0
    %112 = vmatprep.subr.mxu0 0.0
    %113 = vmatpush2.msra.mxu0 0.0
    %114 = vmatprep.subr.mxu0 0.0
    %115 = vmatpush2.msra.mxu0 0.0
    %116 = vmatprep.mubr.f32.mxu0 0.0
    %117 = vmatmul.mubr.f32.gmra.mxu0 %v28
    %v118 = vpop.f32.mrf.mxu0
    %v119 = vadd.f32 %v50, %v118
    %v120 = vpop.f32.mrf.mxu0
    %121 = vdwg.mxu0
    %122 = vst [vmem:[%s3] sm:$0xff] %v119
    // Predicated region
    $region18: #{fast_rcnn_predictor_fused.1} parent=1 // pred_check
      _
    $region19: #{fast_rcnn_predictor_fused.1} parent=1 // pred_check_branch
      %124 = sbr.rel (0) target = $region21
    $region20: #{fast_rcnn_predictor_fused.1} parent=1 // pred_region
      _
    $region21: #{fast_rcnn_predictor_fused.1} parent=1 // pred_fallthru
      _
    // Predicated region
    $region22: #{fast_rcnn_predictor_fused.1} parent=1 // pred_check
      _
    $region23: #{fast_rcnn_predictor_fused.1} parent=1 // pred_check_branch
      %126 = sbr.rel (0) target = $region25
    $region24: #{fast_rcnn_predictor_fused.1} parent=1 // pred_region
      _
    $region25: #{fast_rcnn_predictor_fused.1} parent=1 // pred_fallthru
      _
    %127 = vsyncpa [#allocation3], 1

</llo_original>
